<compile_context>
chip_gen: v7x
topology: tpu7x:2x2x1
jax: 0.10.0
libtpu: 0.0.40
codegen_flags: <defaults>
</compile_context>

<pallas_src>
import functools

import jax
import jax.numpy as jnp
from jax.experimental import pallas as pl
from jax.experimental.pallas import tpu as pltpu


def _round_up(n: int, m: int) -> int:
    return (n + m - 1) // m * m


def _gru_kernel(xh_ref, w1_ref, b1_ref, whc_ref, out_ref, *, hp: int):
    xh = xh_ref[...]                      # (TB, Hp + I), layout [h | x]
    h = xh[:, :hp]                        # lane-aligned (Hp is a 128 multiple)

    # One wide MXU matmul: all three gates' x-path + r/u memory path, plus the
    # pre-summed biases.
    pre = (jnp.dot(xh, w1_ref[...], preferred_element_type=jnp.float32)
           + b1_ref[...])                 # (TB, 3*Hp)

    r = jax.nn.sigmoid(pre[:, :hp])
    u = jax.nn.sigmoid(pre[:, hp:2 * hp])
    # Candidate: reset-gated memory path ("linear after reset" per the spec).
    c = jnp.tanh(pre[:, 2 * hp:]
                 + jnp.dot(h * r, whc_ref[...],
                           preferred_element_type=jnp.float32))

    # h*(1-u) + c*u  ==  h + u*(c - h)   (one fewer VPU multiply)
    out_ref[...] = h + u * (c - h)


def gru_forward(x, memory, params):
    """x: (B, I); memory: (B, H).

    params[g] for g in ('r','u','c') is (W_x, b_x, W_h, b_h) with PyTorch
    nn.Linear layout: W_x (H, I), W_h (H, H), b_* (H,).
    """
    B, I = x.shape
    H = memory.shape[1]

    Hp = _round_up(H, 128)                 # lane-dense hidden width
    Bp = _round_up(B, 8)                   # sublane-aligned batch
    TB = Bp if Bp <= 256 else 256          # batch tile (multiple of 8)
    Bp = _round_up(Bp, TB)

    f32 = jnp.float32

    # ---- Fused weight / bias packing (hoist out of any time loop). ----
    w1 = jnp.zeros((Hp + I, 3 * Hp), f32)  # rows: [h (Hp) | x (I)]
    b1 = jnp.zeros((1, 3 * Hp), f32)
    for gi, g in enumerate(("r", "u", "c")):
        w_x, b_x, w_h, b_h = params[g]
        cs = gi * Hp
        if g != "c":  # candidate memory path is reset-gated -> separate matmul
            w1 = w1.at[:H, cs:cs + H].set(w_h.T.astype(f32))
        w1 = w1.at[Hp:Hp + I, cs:cs + H].set(w_x.T.astype(f32))
        b1 = b1.at[0, cs:cs + H].set((b_x + b_h).astype(f32))

    w_hc = jnp.zeros((Hp, Hp), f32)
    w_hc = w_hc.at[:H, :H].set(params["c"][2].T.astype(f32))

    # Concatenated, zero-padded operand [h | x]: one K-reduction on the MXU.
    xh = jnp.zeros((Bp, Hp + I), f32)
    xh = xh.at[:B, :H].set(memory.astype(f32))
    xh = xh.at[:B, Hp:Hp + I].set(x.astype(f32))

    grid = (Bp // TB,)

    flops = 2 * Bp * (Hp + I) * (3 * Hp) + 2 * Bp * Hp * Hp + 6 * Bp * Hp
    transcendentals = 3 * Bp * Hp
    bytes_accessed = 4 * (xh.size + w1.size + b1.size + w_hc.size + Bp * Hp)

    vmem_need = 4 * (2 * (w1.size + b1.size + w_hc.size)     # weights (2 bufs)
                     + 4 * TB * (Hp + I) + 4 * TB * Hp       # dbl-buffered I/O
                     + 8 * TB * Hp)                          # gate temporaries
    vmem_limit = int(min(64 * 1024 * 1024,
                         max(2 * vmem_need, 16 * 1024 * 1024)))

    out_pad = pl.pallas_call(
        functools.partial(_gru_kernel, hp=Hp),
        out_shape=jax.ShapeDtypeStruct((Bp, Hp), f32),
        grid=grid,
        in_specs=[
            pl.BlockSpec((TB, Hp + I), lambda b: (b, 0)),      # [h | x] tile
            pl.BlockSpec((Hp + I, 3 * Hp), lambda b: (0, 0)),  # fused weights
            pl.BlockSpec((1, 3 * Hp), lambda b: (0, 0)),       # fused biases
            pl.BlockSpec((Hp, Hp), lambda b: (0, 0)),          # candidate W_hc
        ],
        out_specs=pl.BlockSpec((TB, Hp), lambda b: (b, 0)),
        compiler_params=pltpu.CompilerParams(
            dimension_semantics=("parallel",),
            vmem_limit_bytes=vmem_limit),
        cost_estimate=pl.CostEstimate(
            flops=flops,
            transcendentals=transcendentals,
            bytes_accessed=bytes_accessed),
    )(xh, w1, b1, w_hc)

    return out_pad[:B, :H]


def _init_gate_params(key, inputs, hidden):
    """PyTorch nn.Linear layout: W (out, in), b (out,). Deterministic."""
    k1, k2, k3, k4 = jax.random.split(key, 4)
    bx = 1.0 / (inputs ** 0.5)
    bh = 1.0 / (hidden ** 0.5)
    w_input = jax.random.uniform(k1, (hidden, inputs), jnp.float32, -bx, bx)
    b_input = jax.random.uniform(k2, (hidden,), jnp.float32, -bx, bx)
    w_memory = jax.random.uniform(k3, (hidden, hidden), jnp.float32, -bh, bh)
    b_memory = jax.random.uniform(k4, (hidden,), jnp.float32, -bh, bh)
    return (w_input, b_input, w_memory, b_memory)


def _gru_ref(x, memory, params):
    """Pure-JAX reference matching the PyTorch module semantics."""
    hi = jax.lax.Precision.HIGHEST

    def gate(g, hvec, act):
        w_x, b_x, w_h, b_h = params[g]
        return act(jnp.dot(x, w_x.T, precision=hi) + b_x
                   + jnp.dot(hvec, w_h.T, precision=hi) + b_h)

    r = gate("r", memory, jax.nn.sigmoid)
    u = gate("u", memory, jax.nn.sigmoid)
    c = gate("c", memory * r, jnp.tanh)
    return memory * (1.0 - u) + c * u


if __name__ == "__main__":
    B, INPUTS, HIDDEN = 8, 16, 32

    key = jax.random.PRNGKey(0)
    kx, kh, kr, ku, kc = jax.random.split(key, 5)

    x = jax.random.normal(kx, (B, INPUTS), jnp.float32)
    memory = jax.random.normal(kh, (B, HIDDEN), jnp.float32)

    params = {
        "r": _init_gate_params(kr, INPUTS, HIDDEN),
        "u": _init_gate_params(ku, INPUTS, HIDDEN),
        "c": _init_gate_params(kc, INPUTS, HIDDEN),
    }

    out = gru_forward(x, memory, params)
    jax.block_until_ready(out)

    ref = _gru_ref(x, memory, params)
    assert out.shape == (B, HIDDEN)
    assert jnp.allclose(out, ref, atol=1e-4, rtol=1e-4), \
        float(jnp.max(jnp.abs(out - ref)))

    print("KERNEL_OK")
</pallas_src>

<mosaic_0001>
module attributes {stable_mosaic.version = 11 : i64} {
  func.func @_gru_kernel(%arg0: i32, %arg1: memref<8x144xf32, #tpu.memory_space<vmem>>, %arg2: memref<144x384xf32, #tpu.memory_space<vmem>>, %arg3: memref<1x384xf32, #tpu.memory_space<vmem>>, %arg4: memref<128x128xf32, #tpu.memory_space<vmem>>, %arg5: memref<8x128xf32, #tpu.memory_space<vmem>>) attributes {dimension_semantics = [#tpu.dimension_semantics<parallel>], iteration_bounds = array<i64: 1>, scalar_prefetch = 0 : i64, scratch_operands = 0 : i64, tpu.core_type = #tpu.core_type<tc>, window_params = [{transform_indices = @transform_0, window_bounds = array<i64: 8, 144>}, {pipeline_mode = #tpu.pipeline_mode<synchronous>, transform_indices = @transform_1, window_bounds = array<i64: 144, 384>}, {pipeline_mode = #tpu.pipeline_mode<synchronous>, transform_indices = @transform_2, window_bounds = array<i64: 1, 384>}, {pipeline_mode = #tpu.pipeline_mode<synchronous>, transform_indices = @transform_3, window_bounds = array<i64: 128, 128>}, {transform_indices = @transform_4, window_bounds = array<i64: 8, 128>}]} {
    %c0 = arith.constant 0 : index
    %c0_0 = arith.constant 0 : index
    %0 = vector.load %arg1[%c0, %c0_0] : memref<8x144xf32, #tpu.memory_space<vmem>>, vector<8x144xf32>
    %1 = vector.extract_strided_slice %0 {offsets = [0, 0], sizes = [8, 128], strides = [1, 1]} : vector<8x144xf32> to vector<8x128xf32>
    %c0_1 = arith.constant 0 : index
    %c0_2 = arith.constant 0 : index
    %2 = vector.load %arg2[%c0_1, %c0_2] : memref<144x384xf32, #tpu.memory_space<vmem>>, vector<144x384xf32>
    %cst = arith.constant dense<0.000000e+00> : vector<8x384xf32>
    %3 = tpu.matmul %0, %2, %cst {dimension_numbers = #tpu.dot_dimension_numbers<[1], [0], [0], [1], [0, 0, 1, 1], [], []>} : vector<8x144xf32>, vector<144x384xf32>, vector<8x384xf32> -> vector<8x384xf32>
    %c0_3 = arith.constant 0 : index
    %c0_4 = arith.constant 0 : index
    %4 = vector.load %arg3[%c0_3, %c0_4] : memref<1x384xf32, #tpu.memory_space<vmem>>, vector<1x384xf32>
    %5 = vector.broadcast %4 : vector<1x384xf32> to vector<8x384xf32>
    %6 = arith.addf %3, %5 : vector<8x384xf32>
    %7 = vector.extract_strided_slice %6 {offsets = [0, 0], sizes = [8, 128], strides = [1, 1]} : vector<8x384xf32> to vector<8x128xf32>
    %8 = arith.negf %7 : vector<8x128xf32>
    %9 = math.exp %8 : vector<8x128xf32>
    %cst_5 = arith.constant 1.000000e+00 : f32
    %10 = vector.broadcast %cst_5 : f32 to vector<8x128xf32>
    %11 = arith.addf %10, %9 : vector<8x128xf32>
    %12 = arith.divf %10, %11 : vector<8x128xf32>
    %13 = vector.extract_strided_slice %6 {offsets = [0, 128], sizes = [8, 128], strides = [1, 1]} : vector<8x384xf32> to vector<8x128xf32>
    %14 = arith.negf %13 : vector<8x128xf32>
    %15 = math.exp %14 : vector<8x128xf32>
    %cst_6 = arith.constant 1.000000e+00 : f32
    %16 = vector.broadcast %cst_6 : f32 to vector<8x128xf32>
    %17 = arith.addf %16, %15 : vector<8x128xf32>
    %18 = arith.divf %16, %17 : vector<8x128xf32>
    %19 = vector.extract_strided_slice %6 {offsets = [0, 256], sizes = [8, 128], strides = [1, 1]} : vector<8x384xf32> to vector<8x128xf32>
    %20 = arith.mulf %1, %12 : vector<8x128xf32>
    %c0_7 = arith.constant 0 : index
    %c0_8 = arith.constant 0 : index
    %21 = vector.load %arg4[%c0_7, %c0_8] : memref<128x128xf32, #tpu.memory_space<vmem>>, vector<128x128xf32>
    %cst_9 = arith.constant dense<0.000000e+00> : vector<8x128xf32>
    %22 = tpu.matmul %20, %21, %cst_9 {dimension_numbers = #tpu.dot_dimension_numbers<[1], [0], [0], [1], [0, 0, 1, 1], [], []>} : vector<8x128xf32>, vector<128x128xf32>, vector<8x128xf32> -> vector<8x128xf32>
    %23 = arith.addf %19, %22 : vector<8x128xf32>
    %24 = math.tanh %23 : vector<8x128xf32>
    %25 = arith.subf %24, %1 : vector<8x128xf32>
    %26 = arith.mulf %18, %25 : vector<8x128xf32>
    %27 = arith.addf %1, %26 : vector<8x128xf32>
    %c0_10 = arith.constant 0 : index
    %c0_11 = arith.constant 0 : index
    %28 = vector.load %arg5[%c0_10, %c0_11] : memref<8x128xf32, #tpu.memory_space<vmem>>, vector<8x128xf32>
    tpu.vector_store %arg5[%c0_10, %c0_11], %27 {strides = array<i32>} : memref<8x128xf32, #tpu.memory_space<vmem>>, vector<8x128xf32>,
    return
  }
  func.func @transform_0(%arg0: i32) -> (i32, i32) {
    %c0_i32 = arith.constant 0 : i32
    %c0_i32_0 = arith.constant 0 : i32
    return %arg0, %c0_i32 : i32, i32
  }
  func.func @transform_1(%arg0: i32) -> (i32, i32) {
    %c0_i32 = arith.constant 0 : i32
    %c0_i32_0 = arith.constant 0 : i32
    %c0_i32_1 = arith.constant 0 : i32
    return %c0_i32, %c0_i32_0 : i32, i32
  }
  func.func @transform_2(%arg0: i32) -> (i32, i32) {
    %c0_i32 = arith.constant 0 : i32
    %c0_i32_0 = arith.constant 0 : i32
    %c0_i32_1 = arith.constant 0 : i32
    return %c0_i32, %c0_i32_0 : i32, i32
  }
  func.func @transform_3(%arg0: i32) -> (i32, i32) {
    %c0_i32 = arith.constant 0 : i32
    %c0_i32_0 = arith.constant 0 : i32
    %c0_i32_1 = arith.constant 0 : i32
    return %c0_i32, %c0_i32_0 : i32, i32
  }
  func.func @transform_4(%arg0: i32) -> (i32, i32) {
    %c0_i32 = arith.constant 0 : i32
    %c0_i32_0 = arith.constant 0 : i32
    return %arg0, %c0_i32 : i32, i32
  }
}

</mosaic_0001>

<llo_original>
// kernel: tpu_custom_call.1
$region0: #{tpu_custom_call.1}
  #allocation0 [shape = 'u32[]', space=smem, size = 0x4, offset = 0x4, fixed_abs, tag = 'smem constant byte address 0x4 - core index']
  #allocation1 [shape = 'u32[144,128]{1,0:T(1,128)}', space=vmem, size = 0x12000, scoped, tag = 'internal scratch']
  %s0 = inlined_call_operand.hbm [shape: f32[8,144], index: 0, kind: input, shape index: {}]
  %s1 = inlined_call_operand.hbm [shape: f32[144,384], index: 1, kind: input, shape index: {}]
  %s2 = inlined_call_operand.vmem [shape: f32[1,384], index: 2, kind: input, shape index: {}]
  %s3 = inlined_call_operand.hbm [shape: f32[128,128], index: 3, kind: input, shape index: {}]
  %s4 = inlined_call_operand.hbm [shape: f32[8,128], index: 4, kind: output, shape index: {}]
  %s5 = sld [smem:[#allocation0]]
  $region38: #{tpu_custom_call.1} parent=0
    _
  %s7 = ssub.s32 1, %s5
  %s8 = scalar_select 0, %s7, %s5
  $region1: #{tpu_custom_call.1} parent=0
    #allocation2 [shape = 'u8[8192]{0}', space=vmem, size = 0x2000, scoped, tag = 'input window, operand 0, single buffered']
    #allocation3 [shape = 's32[1]{0}', space=sflag, size = 0x4, scoped, tag = 'scoped memory for tpu_custom_call.1']
    #allocation4 [shape = 's32[1]{0}', space=sflag, size = 0x4, scoped, tag = 'scoped memory for tpu_custom_call.1']
    #allocation5 [shape = 'u8[221184]{0}', space=vmem, size = 0x36000, scoped, tag = 'input window, operand 1, single buffered']
    #allocation6 [shape = 's32[1]{0}', space=sflag, size = 0x4, scoped, tag = 'scoped memory for tpu_custom_call.1']
    #allocation7 [shape = 'u8[65536]{0}', space=vmem, size = 0x10000, scoped, tag = 'input window, operand 3, single buffered']
    #allocation8 [shape = 'u8[4096]{0}', space=vmem, size = 0x1000, scoped, tag = 'output window, operand 0, single buffered']
    %9 = vsyncpa [#allocation3], 0
    %10 = vsyncpa [#allocation6], 0
    %11 = vsyncpa [#allocation4], 0
    // Predicated region
    $region2: #{tpu_custom_call.1} parent=1 // pred_check
      _
    $region3: #{tpu_custom_call.1} parent=1 // pred_check_branch
      %13 = sbr.rel (0) target = $region5
    $region4: #{tpu_custom_call.1} parent=1 // pred_region
      %s15 = ssub.s32 256, 256
      %16 = vsyncadd [#allocation3], %s15
      %s18 = sshll.u32 [#allocation2], 4
      %s19 = int_to_ptr.vmem [resolvable:$true] %s18
      %21 = dma.hbm_to_vmem [thread:$0]  %s0, 256, %s19, [#allocation3]
    $region5: #{tpu_custom_call.1} parent=1 // pred_fallthru
      _
    // Predicated region
    $region6: #{tpu_custom_call.1} parent=1 // pred_check
      _
    $region7: #{tpu_custom_call.1} parent=1 // pred_check_branch
      %23 = sbr.rel (0) target = $region9
    $region8: #{tpu_custom_call.1} parent=1 // pred_region
      %s25 = ssub.s32 6912, 6912
      %26 = vsyncadd [#allocation6], %s25
      %s27 = sshll.u32 [#allocation5], 4
      %s28 = int_to_ptr.vmem [resolvable:$true] %s27
      %33 = dma.hbm_to_vmem [thread:$0]  %s1, 6912, %s28, [#allocation6], 384, 384, 24
    $region9: #{tpu_custom_call.1} parent=1 // pred_fallthru
      _
    // Predicated region
    $region10: #{tpu_custom_call.1} parent=1 // pred_check
      _
    $region11: #{tpu_custom_call.1} parent=1 // pred_check_branch
      %35 = sbr.rel (0) target = $region13
    $region12: #{tpu_custom_call.1} parent=1 // pred_region
      _
    $region13: #{tpu_custom_call.1} parent=1 // pred_fallthru
      _
    // Predicated region
    $region14: #{tpu_custom_call.1} parent=1 // pred_check
      _
    $region15: #{tpu_custom_call.1} parent=1 // pred_check_branch
      %37 = sbr.rel (0) target = $region17
    $region16: #{tpu_custom_call.1} parent=1 // pred_region
      %s39 = ssub.s32 2048, 2048
      %40 = vsyncadd [#allocation6], %s39
      %s41 = sshll.u32 [#allocation7], 4
      %s42 = int_to_ptr.vmem [resolvable:$true] %s41
      %47 = dma.hbm_to_vmem [thread:$0]  %s3, 2048, %s42, [#allocation6], 128, 128, 8
    $region17: #{tpu_custom_call.1} parent=1 // pred_fallthru
      _
    // Predicated region
    $region18: #{tpu_custom_call.1} parent=1 // pred_check
      _
    $region19: #{tpu_custom_call.1} parent=1 // pred_check_branch
      %49 = sbr.rel (0) target = $region21
    $region20: #{tpu_custom_call.1} parent=1 // pred_region
      %50 = dma.done [#allocation3], 256
    $region21: #{tpu_custom_call.1} parent=1 // pred_fallthru
      _
    // Predicated region
    $region22: #{tpu_custom_call.1} parent=1 // pred_check
      _
    $region23: #{tpu_custom_call.1} parent=1 // pred_check_branch
      %52 = sbr.rel (0) target = $region25
    $region24: #{tpu_custom_call.1} parent=1 // pred_region
      %53 = dma.done [#allocation6], 6912
    $region25: #{tpu_custom_call.1} parent=1 // pred_fallthru
      _
    // Predicated region
    $region26: #{tpu_custom_call.1} parent=1 // pred_check
      _
    $region27: #{tpu_custom_call.1} parent=1 // pred_check_branch
      %55 = sbr.rel (0) target = $region29
    $region28: #{tpu_custom_call.1} parent=1 // pred_region
      %56 = dma.done [#allocation6], 2048
    $region29: #{tpu_custom_call.1} parent=1 // pred_fallthru
      _
    %v57 = vld [vmem:[#allocation2] sm:$0xff]
    %v58 = vld [vmem:[#allocation2 + $0x8] sm:$0xff]
    %v59 = vld [vmem:[#allocation5] sm:$0xff]
    %v60 = vld [vmem:[#allocation5 + $0x8] sm:$0xff]
    %v61 = vld [vmem:[#allocation5 + $0x10] sm:$0xff]
    %v62 = vld [vmem:[#allocation5 + $0x18] sm:$0xff]
    %v63 = vld [vmem:[#allocation5 + $0x20] sm:$0xff]
    %v64 = vld [vmem:[#allocation5 + $0x28] sm:$0xff]
    %v65 = vld [vmem:[#allocation5 + $0x30] sm:$0xff]
    %v66 = vld [vmem:[#allocation5 + $0x38] sm:$0xff]
    %v67 = vld [vmem:[#allocation5 + $0x40] sm:$0xff]
    %v68 = vld [vmem:[#allocation5 + $0x48] sm:$0xff]
    %v69 = vld [vmem:[#allocation5 + $0x50] sm:$0xff]
    %v70 = vld [vmem:[#allocation5 + $0x58] sm:$0xff]
    %v71 = vld [vmem:[#allocation5 + $0x60] sm:$0xff]
    %v72 = vld [vmem:[#allocation5 + $0x68] sm:$0xff]
    %v73 = vld [vmem:[#allocation5 + $0x70] sm:$0xff]
    %v74 = vld [vmem:[#allocation5 + $0x78] sm:$0xff]
    %v75 = vld [vmem:[#allocation5 + $0x80] sm:$0xff]
    %v76 = vld [vmem:[#allocation5 + $0x88] sm:$0xff]
    %v77 = vld [vmem:[#allocation5 + $0x90] sm:$0xff]
    %v78 = vld [vmem:[#allocation5 + $0x98] sm:$0xff]
    %v79 = vld [vmem:[#allocation5 + $0xa0] sm:$0xff]
    %v80 = vld [vmem:[#allocation5 + $0xa8] sm:$0xff]
    %v81 = vld [vmem:[#allocation5 + $0xb0] sm:$0xff]
    %v82 = vld [vmem:[#allocation5 + $0xb8] sm:$0xff]
    %v83 = vld [vmem:[#allocation5 + $0xc0] sm:$0xff]
    %v84 = vld [vmem:[#allocation5 + $0xc8] sm:$0xff]
    %v85 = vld [vmem:[#allocation5 + $0xd0] sm:$0xff]
    %v86 = vld [vmem:[#allocation5 + $0xd8] sm:$0xff]
    %v87 = vld [vmem:[#allocation5 + $0xe0] sm:$0xff]
    %v88 = vld [vmem:[#allocation5 + $0xe8] sm:$0xff]
    %v89 = vld [vmem:[#allocation5 + $0xf0] sm:$0xff]
    %v90 = vld [vmem:[#allocation5 + $0xf8] sm:$0xff]
    %v91 = vld [vmem:[#allocation5 + $0x100] sm:$0xff]
    %v92 = vld [vmem:[#allocation5 + $0x108] sm:$0xff]
    %v93 = vld [vmem:[#allocation5 + $0x110] sm:$0xff]
    %v94 = vld [vmem:[#allocation5 + $0x118] sm:$0xff]
    %v95 = vld [vmem:[#allocation5 + $0x120] sm:$0xff]
    %v96 = vld [vmem:[#allocation5 + $0x128] sm:$0xff]
    %v97 = vld [vmem:[#allocation5 + $0x130] sm:$0xff]
    %v98 = vld [vmem:[#allocation5 + $0x138] sm:$0xff]
    %v99 = vld [vmem:[#allocation5 + $0x140] sm:$0xff]
    %v100 = vld [vmem:[#allocation5 + $0x148] sm:$0xff]
    %v101 = vld [vmem:[#allocation5 + $0x150] sm:$0xff]
    %v102 = vld [vmem:[#allocation5 + $0x158] sm:$0xff]
    %v103 = vld [vmem:[#allocation5 + $0x160] sm:$0xff]
    %v104 = vld [vmem:[#allocation5 + $0x168] sm:$0xff]
    %v105 = vld [vmem:[#allocation5 + $0x170] sm:$0xff]
    %v106 = vld [vmem:[#allocation5 + $0x178] sm:$0xff]
    %v107 = vld [vmem:[#allocation5 + $0x180] sm:$0xff]
    %v108 = vld [vmem:[#allocation5 + $0x188] sm:$0xff]
    %v109 = vld [vmem:[#allocation5 + $0x190] sm:$0xff]
    %v110 = vld [vmem:[#allocation5 + $0x198] sm:$0xff]
    %v111 = vld [vmem:[#allocation5 + $0x1a0] sm:$0xff]
    %v112 = vld [vmem:[#allocation5 + $0x1a8] sm:$0xff]
    %v113 = vld [vmem:[%s2] sm:$0x7]
    %v115 = vlaneseq
    %v116 = vshrl.u32 %v115, 7
    %v117 = vsub.s32 0, %v116
    %v118 = vrot.slane %v113, %v117
    %v119 = vlaneseq
    %v120 = vshrl.u32 %v119, 7
    %v121 = vsub.s32 1, %v120
    %v122 = vrot.slane %v113, %v121
    %v123 = vlaneseq
    %v124 = vshrl.u32 %v123, 7
    %v125 = vsub.s32 2, %v124
    %v126 = vrot.slane %v113, %v125
    %vm130 = vcmask 130048
    %v132 = vsel %vm130, %v58, 0
    %134 = vmatprep.subr.mxu0 %v60
    %135 = vmatpush1.msra.mxu0 %v59
    %136 = vmatprep.subr.mxu0 %v63
    %137 = vmatpush1.msra.mxu0 %v62
    %138 = vmatprep.subr.mxu0 %v66
    %139 = vmatpush1.msra.mxu0 %v65
    %140 = vmatprep.subr.mxu0 %v69
    %141 = vmatpush1.msra.mxu0 %v68
    %142 = vmatprep.subr.mxu0 %v72
    %143 = vmatpush1.msra.mxu0 %v71
    %144 = vmatprep.subr.mxu0 %v75
    %145 = vmatpush1.msra.mxu0 %v74
    %146 = vmatprep.subr.mxu0 %v78
    %147 = vmatpush1.msra.mxu0 %v77
    %148 = vmatprep.subr.mxu0 %v81
    %149 = vmatpush1.msra.mxu0 %v80
    %150 = vmatprep.subr.mxu0 %v84
    %151 = vmatpush1.msra.mxu0 %v83
    %152 = vmatprep.subr.mxu0 %v87
    %153 = vmatpush1.msra.mxu0 %v86
    %154 = vmatprep.subr.mxu0 %v90
    %155 = vmatpush1.msra.mxu0 %v89
    %156 = vmatprep.subr.mxu0 %v93
    %157 = vmatpush1.msra.mxu0 %v92
    %158 = vmatprep.subr.mxu0 %v96
    %159 = vmatpush1.msra.mxu0 %v95
    %160 = vmatprep.subr.mxu0 %v99
    %161 = vmatpush1.msra.mxu0 %v98
    %162 = vmatprep.subr.mxu0 %v102
    %163 = vmatpush1.msra.mxu0 %v101
    %164 = vmatprep.subr.mxu0 %v105
    %165 = vmatpush1.msra.mxu0 %v104
    %166 = vmatprep.subr.mxu0 %v108
    %167 = vmatpush1.msra.mxu0 %v107
    %168 = vmatprep.subr.mxu0 %v111
    %169 = vmatpush1.msra.mxu0 %v110
    %170 = vmatprep.subr.mxu0 0.0
    %171 = vmatpush1.msra.mxu0 0.0
    %172 = vmatprep.subr.mxu0 0.0
    %173 = vmatpush1.msra.mxu0 0.0
    %174 = vmatprep.subr.mxu0 0.0
    %175 = vmatpush1.msra.mxu0 0.0
    %176 = vmatprep.subr.mxu0 0.0
    %177 = vmatpush1.msra.mxu0 0.0
    %178 = vmatprep.subr.mxu0 0.0
    %179 = vmatpush1.msra.mxu0 0.0
    %180 = vmatprep.subr.mxu0 0.0
    %181 = vmatpush1.msra.mxu0 0.0
    %182 = vmatprep.subr.mxu0 0.0
    %183 = vmatpush1.msra.mxu0 0.0
    %184 = vmatprep.subr.mxu0 0.0
    %185 = vmatpush1.msra.mxu0 0.0
    %186 = vmatprep.subr.mxu0 0.0
    %187 = vmatpush1.msra.mxu0 0.0
    %188 = vmatprep.subr.mxu0 0.0
    %189 = vmatpush1.msra.mxu0 0.0
    %190 = vmatprep.subr.mxu0 0.0
    %191 = vmatpush1.msra.mxu0 0.0
    %192 = vmatprep.subr.mxu0 0.0
    %193 = vmatpush1.msra.mxu0 0.0
    %194 = vmatprep.subr.mxu0 0.0
    %195 = vmatpush1.msra.mxu0 0.0
    %196 = vmatprep.subr.mxu0 0.0
    %197 = vmatpush1.msra.mxu0 0.0
    %198 = vmatprep.mubr.f32.mxu0 %v132
    %199 = vmatmul.mubr.f32.gmra.mrb[0].mxu0 %v57
    %v200 = vpop.f32.mrb[0].mxu0
    %v201 = vadd.f32 %v118, %v200
    %v202 = vpop.f32.mrb[0].mxu0
    %v203 = vadd.f32 %v122, %v202
    %204 = vdwg.mxu0
    %205 = vmatprep.subr.mxu0 0.0
    %206 = vmatpush1.msra.mxu0 %v61
    %207 = vmatprep.subr.mxu0 0.0
    %208 = vmatpush1.msra.mxu0 %v64
    %209 = vmatprep.subr.mxu0 0.0
    %210 = vmatpush1.msra.mxu0 %v67
    %211 = vmatprep.subr.mxu0 0.0
    %212 = vmatpush1.msra.mxu0 %v70
    %213 = vmatprep.subr.mxu0 0.0
    %214 = vmatpush1.msra.mxu0 %v73
    %215 = vmatprep.subr.mxu0 0.0
    %216 = vmatpush1.msra.mxu0 %v76
    %217 = vmatprep.subr.mxu0 0.0
    %218 = vmatpush1.msra.mxu0 %v79
    %219 = vmatprep.subr.mxu0 0.0
    %220 = vmatpush1.msra.mxu0 %v82
    %221 = vmatprep.subr.mxu0 0.0
    %222 = vmatpush1.msra.mxu0 %v85
    %223 = vmatprep.subr.mxu0 0.0
    %224 = vmatpush1.msra.mxu0 %v88
    %225 = vmatprep.subr.mxu0 0.0
    %226 = vmatpush1.msra.mxu0 %v91
    %227 = vmatprep.subr.mxu0 0.0
    %228 = vmatpush1.msra.mxu0 %v94
    %229 = vmatprep.subr.mxu0 0.0
    %230 = vmatpush1.msra.mxu0 %v97
    %231 = vmatprep.subr.mxu0 0.0
    %232 = vmatpush1.msra.mxu0 %v100
    %233 = vmatprep.subr.mxu0 0.0
    %234 = vmatpush1.msra.mxu0 %v103
    %235 = vmatprep.subr.mxu0 0.0
    %236 = vmatpush1.msra.mxu0 %v106
    %237 = vmatprep.subr.mxu0 0.0
    %238 = vmatpush1.msra.mxu0 %v109
    %239 = vmatprep.subr.mxu0 0.0
    %240 = vmatpush1.msra.mxu0 %v112
    %241 = vmatprep.subr.mxu0 0.0
    %242 = vmatpush1.msra.mxu0 0.0
    %243 = vmatprep.subr.mxu0 0.0
    %244 = vmatpush1.msra.mxu0 0.0
    %245 = vmatprep.subr.mxu0 0.0
    %246 = vmatpush1.msra.mxu0 0.0
    %247 = vmatprep.subr.mxu0 0.0
    %248 = vmatpush1.msra.mxu0 0.0
    %249 = vmatprep.subr.mxu0 0.0
    %250 = vmatpush1.msra.mxu0 0.0
    %251 = vmatprep.subr.mxu0 0.0
    %252 = vmatpush1.msra.mxu0 0.0
    %253 = vmatprep.subr.mxu0 0.0
    %254 = vmatpush1.msra.mxu0 0.0
    %255 = vmatprep.subr.mxu0 0.0
    %256 = vmatpush1.msra.mxu0 0.0
    %257 = vmatprep.subr.mxu0 0.0
    %258 = vmatpush1.msra.mxu0 0.0
    %259 = vmatprep.subr.mxu0 0.0
    %260 = vmatpush1.msra.mxu0 0.0
    %261 = vmatprep.subr.mxu0 0.0
    %262 = vmatpush1.msra.mxu0 0.0
    %263 = vmatprep.subr.mxu0 0.0
    %264 = vmatpush1.msra.mxu0 0.0
    %265 = vmatprep.subr.mxu0 0.0
    %266 = vmatpush1.msra.mxu0 0.0
    %267 = vmatprep.subr.mxu0 0.0
    %268 = vmatpush1.msra.mxu0 0.0
    %269 = vmatprep.mubr.f32.mxu0 %v132
    %270 = vmatmul.mubr.f32.gmra.mrb[0].mxu0 %v57
    %v271 = vpop.f32.mrb[0].mxu0
    %v272 = vadd.f32 %v126, %v271
    %v273 = vpop.f32.mrb[0].mxu0
    %274 = vdwg.mxu0
    %v275 = vxor.u32 %v201, 2147483648
    %v276 = vmul.f32 %v275, 1.442695
    %v277 = vpow.pop %v276
    %v278 = vadd.f32 %v277, 1.0
    %v279 = vrcp.pop %v278
    %v280 = vmul.f32 1.0, %v279
    %v281 = vxor.u32 %v203, 2147483648
    %v282 = vmul.f32 %v281, 1.442695
    %v283 = vpow.pop %v282
    %v284 = vadd.f32 %v283, 1.0
    %v285 = vrcp.pop %v284
    %v286 = vmul.f32 1.0, %v285
    %v287 = vmul.f32 %v57, %v280
    %v288 = vld [vmem:[#allocation7] sm:$0xff]
    %v289 = vld [vmem:[#allocation7 + $0x8] sm:$0xff]
    %v290 = vld [vmem:[#allocation7 + $0x10] sm:$0xff]
    %v291 = vld [vmem:[#allocation7 + $0x18] sm:$0xff]
    %v292 = vld [vmem:[#allocation7 + $0x20] sm:$0xff]
    %v293 = vld [vmem:[#allocation7 + $0x28] sm:$0xff]
    %v294 = vld [vmem:[#allocation7 + $0x30] sm:$0xff]
    %v295 = vld [vmem:[#allocation7 + $0x38] sm:$0xff]
    %v296 = vld [vmem:[#allocation7 + $0x40] sm:$0xff]
    %v297 = vld [vmem:[#allocation7 + $0x48] sm:$0xff]
    %v298 = vld [vmem:[#allocation7 + $0x50] sm:$0xff]
    %v299 = vld [vmem:[#allocation7 + $0x58] sm:$0xff]
    %v300 = vld [vmem:[#allocation7 + $0x60] sm:$0xff]
    %v301 = vld [vmem:[#allocation7 + $0x68] sm:$0xff]
    %v302 = vld [vmem:[#allocation7 + $0x70] sm:$0xff]
    %v303 = vld [vmem:[#allocation7 + $0x78] sm:$0xff]
    %304 = vmatprep.subr.mxu0 0.0
    %305 = vmatpush1.msra.mxu0 %v288
    %306 = vmatprep.subr.mxu0 0.0
    %307 = vmatpush1.msra.mxu0 %v289
    %308 = vmatprep.subr.mxu0 0.0
    %309 = vmatpush1.msra.mxu0 %v290
    %310 = vmatprep.subr.mxu0 0.0
    %311 = vmatpush1.msra.mxu0 %v291
    %312 = vmatprep.subr.mxu0 0.0
    %313 = vmatpush1.msra.mxu0 %v292
    %314 = vmatprep.subr.mxu0 0.0
    %315 = vmatpush1.msra.mxu0 %v293
    %316 = vmatprep.subr.mxu0 0.0
    %317 = vmatpush1.msra.mxu0 %v294
    %318 = vmatprep.subr.mxu0 0.0
    %319 = vmatpush1.msra.mxu0 %v295
    %320 = vmatprep.subr.mxu0 0.0
    %321 = vmatpush1.msra.mxu0 %v296
    %322 = vmatprep.subr.mxu0 0.0
    %323 = vmatpush1.msra.mxu0 %v297
    %324 = vmatprep.subr.mxu0 0.0
    %325 = vmatpush1.msra.mxu0 %v298
    %326 = vmatprep.subr.mxu0 0.0
    %327 = vmatpush1.msra.mxu0 %v299
    %328 = vmatprep.subr.mxu0 0.0
    %329 = vmatpush1.msra.mxu0 %v300
    %330 = vmatprep.subr.mxu0 0.0
    %331 = vmatpush1.msra.mxu0 %v301
    %332 = vmatprep.subr.mxu0 0.0
    %333 = vmatpush1.msra.mxu0 %v302
    %334 = vmatprep.subr.mxu0 0.0
    %335 = vmatpush1.msra.mxu0 %v303
    %336 = vmatprep.subr.mxu0 0.0
    %337 = vmatpush1.msra.mxu0 0.0
    %338 = vmatprep.subr.mxu0 0.0
    %339 = vmatpush1.msra.mxu0 0.0
    %340 = vmatprep.subr.mxu0 0.0
    %341 = vmatpush1.msra.mxu0 0.0
    %342 = vmatprep.subr.mxu0 0.0
    %343 = vmatpush1.msra.mxu0 0.0
    %344 = vmatprep.subr.mxu0 0.0
    %345 = vmatpush1.msra.mxu0 0.0
    %346 = vmatprep.subr.mxu0 0.0
    %347 = vmatpush1.msra.mxu0 0.0
    %348 = vmatprep.subr.mxu0 0.0
    %349 = vmatpush1.msra.mxu0 0.0
    %350 = vmatprep.subr.mxu0 0.0
    %351 = vmatpush1.msra.mxu0 0.0
    %352 = vmatprep.subr.mxu0 0.0
    %353 = vmatpush1.msra.mxu0 0.0
    %354 = vmatprep.subr.mxu0 0.0
    %355 = vmatpush1.msra.mxu0 0.0
    %356 = vmatprep.subr.mxu0 0.0
    %357 = vmatpush1.msra.mxu0 0.0
    %358 = vmatprep.subr.mxu0 0.0
    %359 = vmatpush1.msra.mxu0 0.0
    %360 = vmatprep.subr.mxu0 0.0
    %361 = vmatpush1.msra.mxu0 0.0
    %362 = vmatprep.subr.mxu0 0.0
    %363 = vmatpush1.msra.mxu0 0.0
    %364 = vmatprep.subr.mxu0 0.0
    %365 = vmatpush1.msra.mxu0 0.0
    %366 = vmatprep.subr.mxu0 0.0
    %367 = vmatpush1.msra.mxu0 0.0
    %368 = vmatprep.mubr.f32.mxu0 0.0
    %369 = vmatmul.mubr.f32.gmra.mrb[0].mxu0 %v287
    %v370 = vpop.f32.mrb[0].mxu0
    %v371 = vadd.f32 0.0, %v370
    %v372 = vpop.f32.mrb[0].mxu0
    %373 = vdwg.mxu0
    %v374 = vadd.f32 %v272, %v371
    %v375 = vtanh.pop %v374
    %v376 = vsub.f32 %v375, %v57
    %v377 = vmul.f32 %v286, %v376
    %v378 = vadd.f32 %v57, %v377
    %379 = vst [vmem:[#allocation8] sm:$0xff] %v378
    // Predicated region
    $region30: #{tpu_custom_call.1} parent=1 // pred_check
      _
    $region31: #{tpu_custom_call.1} parent=1 // pred_check_branch
      %381 = sbr.rel (0) target = $region33
    $region32: #{tpu_custom_call.1} parent=1 // pred_region
      %s383 = ssub.s32 128, 128
      %384 = vsyncadd [#allocation4], %s383
      %s386 = sshll.u32 [#allocation8], 4
      %s387 = int_to_ptr.vmem [resolvable:$true] %s386
      %389 = dma.vmem_to_hbm [thread:$0]  %s387, 128, %s4, [#allocation4]
    $region33: #{tpu_custom_call.1} parent=1 // pred_fallthru
      _
    // Predicated region
    $region34: #{tpu_custom_call.1} parent=1 // pred_check
      _
    $region35: #{tpu_custom_call.1} parent=1 // pred_check_branch
      %391 = sbr.rel (0) target = $region37
    $region36: #{tpu_custom_call.1} parent=1 // pred_region
      %392 = dma.done [#allocation4], 128
    $region37: #{tpu_custom_call.1} parent=1 // pred_fallthru
      _
    %393 = vsyncpa [#allocation3], 1
    %394 = vsyncpa [#allocation6], 1
    %395 = vsyncpa [#allocation4], 1

</llo_original>
